<compile_context>
chip_gen: v5e
topology: v5e:2x2
jax: 0.10.0
libtpu: 0.0.40
codegen_flags: <defaults>
</compile_context>

<pallas_src>
import jax
import jax.numpy as jnp
from jax.experimental import pallas as pl
from jax.experimental.pallas import tpu as pltpu


def _round_up(x, m):
    return ((x + m - 1) // m) * m


def ffn_kernel(x_ref, w1_ref, b1_ref, w2_ref, b2_ref, o_ref, acc_ref):
    # x_ref:  (tm, d_model)   compute dtype (bf16)
    # w1_ref: (d_model, tf)   compute dtype,  b1_ref: (1, tf)      f32
    # w2_ref: (tf, d_model)   compute dtype,  b2_ref: (1, d_model) f32
    # acc_ref:(tm, d_model)   f32 accumulator over d_ff chunks
    k = pl.program_id(1)

    @pl.when(k == 0)
    def _():
        acc_ref[...] = jnp.zeros_like(acc_ref)

    # First matmul (this d_ff chunk) on the MXU with f32 accumulation;
    # bias add + ReLU in f32.  ReLU is elementwise over d_ff, so chunking
    # the d_ff axis is exact.
    h = jnp.dot(x_ref[...], w1_ref[...], preferred_element_type=jnp.float32)
    h = jnp.maximum(h + b1_ref[...], 0.0)

    # Second matmul: this chunk's partial contribution, accumulated in f32.
    acc_ref[...] += jnp.dot(h.astype(w2_ref.dtype), w2_ref[...],
                            preferred_element_type=jnp.float32)

    @pl.when(k == pl.num_programs(1) - 1)
    def _():
        o_ref[...] = (acc_ref[...] + b2_ref[...]).astype(o_ref.dtype)


def feed_forward(x, w1, b1, w2, b2, *, tm=256, tf=512,
                 compute_dtype=jnp.bfloat16,
                 vmem_limit_bytes=64 * 1024 * 1024):
    """linear2(relu(linear1(x))) for x: [batch, seq, d_model]."""
    batch, seq, d_model = x.shape
    d_ff = w1.shape[1]
    out_dtype = x.dtype
    M = batch * seq

    csize = jnp.dtype(compute_dtype).itemsize
    osize = jnp.dtype(out_dtype).itemsize

    # ---- tile selection -------------------------------------------------
    tm = max(8, _round_up(min(tm, M), 8))
    tf = min(tf, d_ff)
    if tf < d_ff:
        tf = max(128, (tf // 128) * 128)  # d_ff chunks must stay lane aligned

    def step_bytes(tm_, tf_):
        return (2 * tm_ * d_model * csize          # x rows (double-buffered)
                + 2 * tm_ * d_model * osize        # out rows (double-buffered)
                + tm_ * d_model * 4                # f32 accumulator scratch
                + tm_ * tf_ * 4                    # f32 intermediate h
                + 2 * d_model * tf_ * csize        # w1 chunk (double-buffered)
                + 2 * tf_ * d_model * csize        # w2 chunk (double-buffered)
                + 2 * tf_ * 4 + 2 * d_model * 4)   # biases

    budget = int(vmem_limit_bytes * 0.6)
    # Prefer shrinking the d_ff chunk first (keeps the row tile / output slab
    # large and lane-dense), then the row tile.
    while step_bytes(tm, tf) > budget and 128 < tf < d_ff:
        tf = max(128, tf // 2)
    while step_bytes(tm, tf) > budget and tm > 8:
        tm = max(8, tm // 2)

    M_pad = _round_up(M, tm)
    F_pad = _round_up(d_ff, tf)

    # ---- operand prep (single casts / pads on the host side) -----------
    x2d = x.reshape(M, d_model).astype(compute_dtype)
    if M_pad != M:
        x2d = jnp.pad(x2d, ((0, M_pad - M), (0, 0)))

    w1c = w1.astype(compute_dtype)
    w2c = w2.astype(compute_dtype)
    b1_2d = b1.reshape(1, d_ff).astype(jnp.float32)
    b2_2d = b2.reshape(1, d_model).astype(jnp.float32)
    if F_pad != d_ff:
        w1c = jnp.pad(w1c, ((0, 0), (0, F_pad - d_ff)))
        b1_2d = jnp.pad(b1_2d, ((0, 0), (0, F_pad - d_ff)))
        w2c = jnp.pad(w2c, ((0, F_pad - d_ff), (0, 0)))

    out2d = pl.pallas_call(
        ffn_kernel,
        out_shape=jax.ShapeDtypeStruct((M_pad, d_model), out_dtype),
        grid_spec=pltpu.PrefetchScalarGridSpec(
            num_scalar_prefetch=0,
            grid=(M_pad // tm, F_pad // tf),
            in_specs=[
                pl.BlockSpec((tm, d_model), lambda i, k: (i, 0)),   # x rows
                pl.BlockSpec((d_model, tf), lambda i, k: (0, k)),   # w1 chunk
                pl.BlockSpec((1, tf), lambda i, k: (0, k)),         # b1 chunk
                pl.BlockSpec((tf, d_model), lambda i, k: (k, 0)),   # w2 chunk
                pl.BlockSpec((1, d_model), lambda i, k: (0, 0)),    # b2
            ],
            out_specs=pl.BlockSpec((tm, d_model), lambda i, k: (i, 0)),
            scratch_shapes=[pltpu.VMEM((tm, d_model), jnp.float32)],
        ),
        compiler_params=pltpu.CompilerParams(
            dimension_semantics=("parallel", "arbitrary"),  # megacore on rows
            vmem_limit_bytes=vmem_limit_bytes,
        ),
    )(x2d, w1c, b1_2d, w2c, b2_2d)

    if M_pad != M:
        out2d = out2d[:M]
    return out2d.reshape(batch, seq, d_model)


def _reference(x, w1, b1, w2, b2):
    h = jnp.maximum(x @ w1 + b1, 0.0)
    return h @ w2 + b2


if __name__ == "__main__":
    key = jax.random.PRNGKey(0)

    # --- main small test (single d_ff chunk path) ------------------------
    batch, seq, d_model, d_ff = 2, 8, 128, 256
    kx, kw1, kb1, kw2, kb2, kx2 = jax.random.split(key, 6)

    x = jax.random.normal(kx, (batch, seq, d_model), dtype=jnp.float32)
    # Parameters stored (in, out) so the kernel computes x @ W + b.
    w1 = jax.random.normal(kw1, (d_model, d_ff), dtype=jnp.float32) * 0.05
    b1 = jax.random.normal(kb1, (d_ff,), dtype=jnp.float32) * 0.05
    w2 = jax.random.normal(kw2, (d_ff, d_model), dtype=jnp.float32) * 0.05
    b2 = jax.random.normal(kb2, (d_model,), dtype=jnp.float32) * 0.05

    out = jax.block_until_ready(feed_forward(x, w1, b1, w2, b2))
    out_ref = _reference(x, w1, b1, w2, b2)
    assert out.shape == (batch, seq, d_model)
    assert jnp.allclose(out, out_ref, atol=2e-2, rtol=2e-2), (
        "max abs err = %f" % float(jnp.max(jnp.abs(out - out_ref))))

    # --- second test: forces the d_ff-chunked (k-reduction) path and
    #     row-tile padding, small tiles on purpose.
    x_b = jax.random.normal(kx2, (3, 5, d_model), dtype=jnp.float32)
    out_b = jax.block_until_ready(
        feed_forward(x_b, w1, b1, w2, b2, tm=8, tf=128))
    out_b_ref = _reference(x_b, w1, b1, w2, b2)
    assert out_b.shape == (3, 5, d_model)
    assert jnp.allclose(out_b, out_b_ref, atol=3e-2, rtol=3e-2), (
        "max abs err = %f" % float(jnp.max(jnp.abs(out_b - out_b_ref))))

    print("KERNEL_OK")
</pallas_src>

<mosaic_0001>
module attributes {stable_mosaic.version = 11 : i64} {
  func.func @ffn_kernel(%arg0: i32, %arg1: i32, %arg2: memref<16x128xbf16, #tpu.memory_space<vmem>>, %arg3: memref<128x256xbf16, #tpu.memory_space<vmem>>, %arg4: memref<1x256xf32, #tpu.memory_space<vmem>>, %arg5: memref<256x128xbf16, #tpu.memory_space<vmem>>, %arg6: memref<1x128xf32, #tpu.memory_space<vmem>>, %arg7: memref<16x128xf32, #tpu.memory_space<vmem>>, %arg8: memref<16x128xf32, #tpu.memory_space<vmem>>) attributes {dimension_semantics = [#tpu.dimension_semantics<parallel>, #tpu.dimension_semantics<arbitrary>], iteration_bounds = array<i64: 1, 1>, scalar_prefetch = 0 : i64, scratch_operands = 1 : i64, tpu.core_type = #tpu.core_type<tc>, window_params = [{transform_indices = @transform_0, window_bounds = array<i64: 16, 128>}, {transform_indices = @transform_1, window_bounds = array<i64: 128, 256>}, {transform_indices = @transform_2, window_bounds = array<i64: 1, 256>}, {transform_indices = @transform_3, window_bounds = array<i64: 256, 128>}, {pipeline_mode = #tpu.pipeline_mode<synchronous>, transform_indices = @transform_4, window_bounds = array<i64: 1, 128>}, {transform_indices = @transform_5, window_bounds = array<i64: 16, 128>}]} {
    %c0_i32 = arith.constant 0 : i32
    %0 = arith.cmpi eq, %arg1, %c0_i32 : i32
    %1 = arith.extui %0 : i1 to i32
    %c0_i32_0 = arith.constant 0 : i32
    %2 = arith.cmpi ne, %1, %c0_i32_0 : i32
    scf.if %2 {
      %cst_16 = arith.constant 0.000000e+00 : f32
      %20 = vector.broadcast %cst_16 : f32 to vector<16x128xf32>
      %c0_17 = arith.constant 0 : index
      %c0_18 = arith.constant 0 : index
      %21 = vector.load %arg8[%c0_17, %c0_18] : memref<16x128xf32, #tpu.memory_space<vmem>>, vector<16x128xf32>
      tpu.vector_store %arg8[%c0_17, %c0_18], %20 {strides = array<i32>} : memref<16x128xf32, #tpu.memory_space<vmem>>, vector<16x128xf32>,
    } else {
    }
    %c0 = arith.constant 0 : index
    %c0_1 = arith.constant 0 : index
    %3 = vector.load %arg2[%c0, %c0_1] : memref<16x128xbf16, #tpu.memory_space<vmem>>, vector<16x128xbf16>
    %c0_2 = arith.constant 0 : index
    %c0_3 = arith.constant 0 : index
    %4 = vector.load %arg3[%c0_2, %c0_3] : memref<128x256xbf16, #tpu.memory_space<vmem>>, vector<128x256xbf16>
    %cst = arith.constant dense<0.000000e+00> : vector<16x256xf32>
    %5 = tpu.matmul %3, %4, %cst {dimension_numbers = #tpu.dot_dimension_numbers<[1], [0], [0], [1], [0, 0, 1, 1], [], []>} : vector<16x128xbf16>, vector<128x256xbf16>, vector<16x256xf32> -> vector<16x256xf32>
    %c0_4 = arith.constant 0 : index
    %c0_5 = arith.constant 0 : index
    %6 = vector.load %arg4[%c0_4, %c0_5] : memref<1x256xf32, #tpu.memory_space<vmem>>, vector<1x256xf32>
    %7 = vector.broadcast %6 : vector<1x256xf32> to vector<16x256xf32>
    %8 = arith.addf %5, %7 : vector<16x256xf32>
    %cst_6 = arith.constant 0.000000e+00 : f32
    %9 = vector.broadcast %cst_6 : f32 to vector<16x256xf32>
    %10 = arith.maximumf %8, %9 : vector<16x256xf32>
    %c0_7 = arith.constant 0 : index
    %c0_8 = arith.constant 0 : index
    %11 = vector.load %arg8[%c0_7, %c0_8] : memref<16x128xf32, #tpu.memory_space<vmem>>, vector<16x128xf32>
    %12 = arith.truncf %10 : vector<16x256xf32> to vector<16x256xbf16>
    %c0_9 = arith.constant 0 : index
    %c0_10 = arith.constant 0 : index
    %13 = vector.load %arg5[%c0_9, %c0_10] : memref<256x128xbf16, #tpu.memory_space<vmem>>, vector<256x128xbf16>
    %cst_11 = arith.constant dense<0.000000e+00> : vector<16x128xf32>
    %14 = tpu.matmul %12, %13, %cst_11 {dimension_numbers = #tpu.dot_dimension_numbers<[1], [0], [0], [1], [0, 0, 1, 1], [], []>} : vector<16x256xbf16>, vector<256x128xbf16>, vector<16x128xf32> -> vector<16x128xf32>
    %15 = arith.addf %11, %14 : vector<16x128xf32>
    %c0_12 = arith.constant 0 : index
    %c0_13 = arith.constant 0 : index
    %16 = vector.load %arg8[%c0_12, %c0_13] : memref<16x128xf32, #tpu.memory_space<vmem>>, vector<16x128xf32>
    tpu.vector_store %arg8[%c0_12, %c0_13], %15 {strides = array<i32>} : memref<16x128xf32, #tpu.memory_space<vmem>>, vector<16x128xf32>,
    %c0_i32_14 = arith.constant 0 : i32
    %17 = arith.cmpi eq, %arg1, %c0_i32_14 : i32
    %18 = arith.extui %17 : i1 to i32
    %c0_i32_15 = arith.constant 0 : i32
    %19 = arith.cmpi ne, %18, %c0_i32_15 : i32
    scf.if %19 {
      %c0_16 = arith.constant 0 : index
      %c0_17 = arith.constant 0 : index
      %20 = vector.load %arg8[%c0_16, %c0_17] : memref<16x128xf32, #tpu.memory_space<vmem>>, vector<16x128xf32>
      %c0_18 = arith.constant 0 : index
      %c0_19 = arith.constant 0 : index
      %21 = vector.load %arg6[%c0_18, %c0_19] : memref<1x128xf32, #tpu.memory_space<vmem>>, vector<1x128xf32>
      %22 = vector.broadcast %21 : vector<1x128xf32> to vector<16x128xf32>
      %23 = arith.addf %20, %22 : vector<16x128xf32>
      %c0_20 = arith.constant 0 : index
      %c0_21 = arith.constant 0 : index
      %24 = vector.load %arg7[%c0_20, %c0_21] : memref<16x128xf32, #tpu.memory_space<vmem>>, vector<16x128xf32>
      tpu.vector_store %arg7[%c0_20, %c0_21], %23 {strides = array<i32>} : memref<16x128xf32, #tpu.memory_space<vmem>>, vector<16x128xf32>,
    } else {
    }
    return
  }
  func.func @transform_0(%arg0: i32, %arg1: i32) -> (i32, i32) {
    %c0_i32 = arith.constant 0 : i32
    %c0_i32_0 = arith.constant 0 : i32
    return %arg0, %c0_i32 : i32, i32
  }
  func.func @transform_1(%arg0: i32, %arg1: i32) -> (i32, i32) {
    %c0_i32 = arith.constant 0 : i32
    %c0_i32_0 = arith.constant 0 : i32
    return %c0_i32, %arg1 : i32, i32
  }
  func.func @transform_2(%arg0: i32, %arg1: i32) -> (i32, i32) {
    %c0_i32 = arith.constant 0 : i32
    %c0_i32_0 = arith.constant 0 : i32
    return %c0_i32, %arg1 : i32, i32
  }
  func.func @transform_3(%arg0: i32, %arg1: i32) -> (i32, i32) {
    %c0_i32 = arith.constant 0 : i32
    %c0_i32_0 = arith.constant 0 : i32
    return %arg1, %c0_i32 : i32, i32
  }
  func.func @transform_4(%arg0: i32, %arg1: i32) -> (i32, i32) {
    %c0_i32 = arith.constant 0 : i32
    %c0_i32_0 = arith.constant 0 : i32
    %c0_i32_1 = arith.constant 0 : i32
    return %c0_i32, %c0_i32_0 : i32, i32
  }
  func.func @transform_5(%arg0: i32, %arg1: i32) -> (i32, i32) {
    %c0_i32 = arith.constant 0 : i32
    %c0_i32_0 = arith.constant 0 : i32
    return %arg0, %c0_i32 : i32, i32
  }
}

</mosaic_0001>

<llo_original>
// kernel: tpu_custom_call.1
$region0: #{tpu_custom_call.1}
  #allocation0 [shape = 'u32[]', space=smem, size = 0x4, offset = 0x4, fixed_abs, tag = 'smem constant byte address 0x4 - core index']
  #allocation1 [shape = 'u32[72,128]{1,0:T(1,128)}', space=vmem, size = 0x9000, scoped, tag = 'internal scratch']
  #allocation2 [shape = 'f32[16,128]{1,0:T(8,128)}', space=vmem, size = 0x2000, scoped, tag = 'scratch operand']
  %s0 = inlined_call_operand.hbm [shape: bf16[16,128], index: 0, kind: input, shape index: {}]
  %s1 = inlined_call_operand.hbm [shape: bf16[128,256], index: 1, kind: input, shape index: {}]
  %s2 = inlined_call_operand.hbm [shape: f32[1,256], index: 2, kind: input, shape index: {}]
  %s3 = inlined_call_operand.hbm [shape: bf16[256,128], index: 3, kind: input, shape index: {}]
  %s4 = inlined_call_operand.vmem [shape: f32[1,128], index: 4, kind: input, shape index: {}]
  %s5 = inlined_call_operand.hbm [shape: f32[16,128], index: 5, kind: output, shape index: {}]
  %s6 = sld [smem:[#allocation0]]
  $region54: #{tpu_custom_call.1} parent=0
    _
  %s8 = ssub.s32 1, %s6
  %s9 = scalar_select 0, %s8, %s6
  $region1: #{tpu_custom_call.1} parent=0
    #allocation3 [shape = 'u8[4096]{0}', space=vmem, size = 0x1000, scoped, tag = 'input window, operand 0, single buffered']
    #allocation4 [shape = 's32[1]{0}', space=sflag, size = 0x4, scoped, tag = 'scoped memory for tpu_custom_call.1']
    #allocation5 [shape = 's32[1]{0}', space=sflag, size = 0x4, scoped, tag = 'scoped memory for tpu_custom_call.1']
    #allocation6 [shape = 'u8[65536]{0}', space=vmem, size = 0x10000, scoped, tag = 'input window, operand 1, single buffered']
    #allocation7 [shape = 's32[1]{0}', space=sflag, size = 0x4, scoped, tag = 'scoped memory for tpu_custom_call.1']
    #allocation8 [shape = 'u8[1024]{0}', space=vmem, size = 0x400, scoped, tag = 'input window, operand 2, single buffered']
    #allocation9 [shape = 'u8[65536]{0}', space=vmem, size = 0x10000, scoped, tag = 'input window, operand 3, single buffered']
    #allocation10 [shape = 's32[1]{0}', space=sflag, size = 0x4, scoped, tag = 'scoped memory for tpu_custom_call.1']
    #allocation11 [shape = 'u8[8192]{0}', space=vmem, size = 0x2000, scoped, tag = 'output window, operand 0, single buffered']
    %10 = vsyncpa [#allocation4], 0
    %11 = vsyncpa [#allocation7], 0
    %12 = vsyncpa [#allocation10], 0
    %13 = vsyncpa [#allocation5], 0
    // Predicated region
    $region2: #{tpu_custom_call.1} parent=1 // pred_check
      _
    $region3: #{tpu_custom_call.1} parent=1 // pred_check_branch
      %15 = sbr.rel (0) target = $region5
    $region4: #{tpu_custom_call.1} parent=1 // pred_region
      %17 = vsyncadd [#allocation4], 0
      %s18 = sshll.u32 %s0, 4
      %s19 = int_to_ptr.hbm [resolvable:$true] %s18
      %s20 = sshll.u32 [#allocation3], 4
      %s21 = int_to_ptr.vmem [resolvable:$true] %s20
      %26 = dma.hbm_to_vmem [thread:$0]  %s19, 128, %s21, [#allocation4], 64, 64, 4
    $region5: #{tpu_custom_call.1} parent=1 // pred_fallthru
      _
    // Predicated region
    $region6: #{tpu_custom_call.1} parent=1 // pred_check
      _
    $region7: #{tpu_custom_call.1} parent=1 // pred_check_branch
      %28 = sbr.rel (0) target = $region9
    $region8: #{tpu_custom_call.1} parent=1 // pred_region
      %30 = vsyncadd [#allocation7], 0
      %s31 = sshll.u32 %s1, 4
      %s32 = int_to_ptr.hbm [resolvable:$true] %s31
      %s33 = sshll.u32 [#allocation6], 4
      %s34 = int_to_ptr.vmem [resolvable:$true] %s33
      %39 = dma.hbm_to_vmem [thread:$0]  %s32, 2048, %s34, [#allocation7], 128, 128, 8
    $region9: #{tpu_custom_call.1} parent=1 // pred_fallthru
      _
    // Predicated region
    $region10: #{tpu_custom_call.1} parent=1 // pred_check
      _
    $region11: #{tpu_custom_call.1} parent=1 // pred_check_branch
      %41 = sbr.rel (0) target = $region13
    $region12: #{tpu_custom_call.1} parent=1 // pred_region
      %43 = vsyncadd [#allocation7], 0
      %s45 = sshll.u32 %s2, 4
      %s46 = int_to_ptr.hbm [resolvable:$true] %s45
      %s47 = sshll.u32 [#allocation8], 4
      %s48 = int_to_ptr.vmem [resolvable:$true] %s47
      %50 = dma.hbm_to_vmem [thread:$0]  %s46, 32, %s48, [#allocation7]
    $region13: #{tpu_custom_call.1} parent=1 // pred_fallthru
      _
    // Predicated region
    $region14: #{tpu_custom_call.1} parent=1 // pred_check
      _
    $region15: #{tpu_custom_call.1} parent=1 // pred_check_branch
      %52 = sbr.rel (0) target = $region17
    $region16: #{tpu_custom_call.1} parent=1 // pred_region
      %54 = vsyncadd [#allocation10], 0
      %s55 = sshll.u32 %s3, 4
      %s56 = int_to_ptr.hbm [resolvable:$true] %s55
      %s57 = sshll.u32 [#allocation9], 4
      %s58 = int_to_ptr.vmem [resolvable:$true] %s57
      %63 = dma.hbm_to_vmem [thread:$0]  %s56, 2048, %s58, [#allocation10], 64, 64, 4
    $region17: #{tpu_custom_call.1} parent=1 // pred_fallthru
      _
    // Predicated region
    $region18: #{tpu_custom_call.1} parent=1 // pred_check
      _
    $region19: #{tpu_custom_call.1} parent=1 // pred_check_branch
      %65 = sbr.rel (0) target = $region21
    $region20: #{tpu_custom_call.1} parent=1 // pred_region
      _
    $region21: #{tpu_custom_call.1} parent=1 // pred_fallthru
      _
    // Predicated region
    $region22: #{tpu_custom_call.1} parent=1 // pred_check
      _
    $region23: #{tpu_custom_call.1} parent=1 // pred_check_branch
      %67 = sbr.rel (0) target = $region25
    $region24: #{tpu_custom_call.1} parent=1 // pred_region
      %69 = dma.done [#allocation4], 128
    $region25: #{tpu_custom_call.1} parent=1 // pred_fallthru
      _
    // Predicated region
    $region26: #{tpu_custom_call.1} parent=1 // pred_check
      _
    $region27: #{tpu_custom_call.1} parent=1 // pred_check_branch
      %71 = sbr.rel (0) target = $region29
    $region28: #{tpu_custom_call.1} parent=1 // pred_region
      %73 = dma.done [#allocation7], 2048
    $region29: #{tpu_custom_call.1} parent=1 // pred_fallthru
      _
    // Predicated region
    $region30: #{tpu_custom_call.1} parent=1 // pred_check
      _
    $region31: #{tpu_custom_call.1} parent=1 // pred_check_branch
      %75 = sbr.rel (0) target = $region33
    $region32: #{tpu_custom_call.1} parent=1 // pred_region
      %77 = dma.done [#allocation7], 32
    $region33: #{tpu_custom_call.1} parent=1 // pred_fallthru
      _
    // Predicated region
    $region34: #{tpu_custom_call.1} parent=1 // pred_check
      _
    $region35: #{tpu_custom_call.1} parent=1 // pred_check_branch
      %79 = sbr.rel (0) target = $region37
    $region36: #{tpu_custom_call.1} parent=1 // pred_region
      %81 = dma.done [#allocation10], 2048
    $region37: #{tpu_custom_call.1} parent=1 // pred_fallthru
      _
    %p82 = scmp.eq.s32.totalorder 0, 0
    // Predicated region
    $region38: #{tpu_custom_call.1} parent=1 // pred_check
      %p83 = pneg %p82
    $region39: #{tpu_custom_call.1} parent=1 // pred_check_branch
      %85 = sbr.rel (%p83) target = $region41
    $region40: #{tpu_custom_call.1} parent=1 // pred_region
      %86 = vst [vmem:[#allocation2] sm:$0xff] 0.0
      %87 = vst [vmem:[#allocation2 + $0x8] sm:$0xff] 0.0
    $region41: #{tpu_custom_call.1} parent=1 // pred_fallthru
      _
    %v88 = vld [vmem:[#allocation3] sm:$0xf]
    %v89 = vld [vmem:[#allocation3 + $0x4] sm:$0xf]
    %v90 = vld [vmem:[#allocation6] sm:$0xff]
    %v91 = vld [vmem:[#allocation6 + $0x8] sm:$0xff]
    %v92 = vld [vmem:[#allocation6 + $0x10] sm:$0xff]
    %v93 = vld [vmem:[#allocation6 + $0x18] sm:$0xff]
    %v94 = vld [vmem:[#allocation6 + $0x20] sm:$0xff]
    %v95 = vld [vmem:[#allocation6 + $0x28] sm:$0xff]
    %v96 = vld [vmem:[#allocation6 + $0x30] sm:$0xff]
    %v97 = vld [vmem:[#allocation6 + $0x38] sm:$0xff]
    %v98 = vld [vmem:[#allocation6 + $0x40] sm:$0xff]
    %v99 = vld [vmem:[#allocation6 + $0x48] sm:$0xff]
    %v100 = vld [vmem:[#allocation6 + $0x50] sm:$0xff]
    %v101 = vld [vmem:[#allocation6 + $0x58] sm:$0xff]
    %v102 = vld [vmem:[#allocation6 + $0x60] sm:$0xff]
    %v103 = vld [vmem:[#allocation6 + $0x68] sm:$0xff]
    %v104 = vld [vmem:[#allocation6 + $0x70] sm:$0xff]
    %v105 = vld [vmem:[#allocation6 + $0x78] sm:$0xff]
    %v106 = vld [vmem:[#allocation8] sm:$0x3]
    %v108 = vperm.slane %v106, 0
    %v109 = vperm.slane %v106, 1
    %v114 = vunpack.c.l.b16 %v88
    %v115 = vunpack.c.l.b16 %v89
    %v116 = vpack.c.b16 %v115, %v114
    %v134 = vunpack.c.l.b16 %v90
    %v135 = vunpack.c.h.b16 %v90
    %v136 = vunpack.c.l.b16 %v91
    %v137 = vunpack.c.h.b16 %v91
    %v138 = vunpack.c.l.b16 %v92
    %v139 = vunpack.c.h.b16 %v92
    %v140 = vunpack.c.l.b16 %v93
    %v141 = vunpack.c.h.b16 %v93
    %v142 = vunpack.c.l.b16 %v94
    %v143 = vunpack.c.h.b16 %v94
    %v144 = vunpack.c.l.b16 %v95
    %v145 = vunpack.c.h.b16 %v95
    %v146 = vunpack.c.l.b16 %v96
    %v147 = vunpack.c.h.b16 %v96
    %v148 = vunpack.c.l.b16 %v97
    %v149 = vunpack.c.h.b16 %v97
    %v150 = vunpack.c.l.b16 %v98
    %v151 = vunpack.c.h.b16 %v98
    %v152 = vunpack.c.l.b16 %v99
    %v153 = vunpack.c.h.b16 %v99
    %v154 = vunpack.c.l.b16 %v100
    %v155 = vunpack.c.h.b16 %v100
    %v156 = vunpack.c.l.b16 %v101
    %v157 = vunpack.c.h.b16 %v101
    %v158 = vunpack.c.l.b16 %v102
    %v159 = vunpack.c.h.b16 %v102
    %v160 = vunpack.c.l.b16 %v103
    %v161 = vunpack.c.h.b16 %v103
    %v162 = vunpack.c.l.b16 %v104
    %v163 = vunpack.c.h.b16 %v104
    %v164 = vunpack.c.l.b16 %v105
    %v165 = vunpack.c.h.b16 %v105
    %v166 = vpack.c.b16 %v136, %v134
    %v167 = vpack.c.b16 %v137, %v135
    %v168 = vpack.c.b16 %v140, %v138
    %v169 = vpack.c.b16 %v141, %v139
    %v170 = vpack.c.b16 %v144, %v142
    %v171 = vpack.c.b16 %v145, %v143
    %v172 = vpack.c.b16 %v148, %v146
    %v173 = vpack.c.b16 %v149, %v147
    %v174 = vpack.c.b16 %v152, %v150
    %v175 = vpack.c.b16 %v153, %v151
    %v176 = vpack.c.b16 %v156, %v154
    %v177 = vpack.c.b16 %v157, %v155
    %v178 = vpack.c.b16 %v160, %v158
    %v179 = vpack.c.b16 %v161, %v159
    %v180 = vpack.c.b16 %v164, %v162
    %v181 = vpack.c.b16 %v165, %v163
    %198 = vmatpush.bf16.msra.mxu0 %v180
    %199 = vmatpush.bf16.msra.mxu0 %v178
    %200 = vmatpush.bf16.msra.mxu0 %v176
    %201 = vmatpush.bf16.msra.mxu0 %v174
    %202 = vmatpush.bf16.msra.mxu0 %v172
    %203 = vmatpush.bf16.msra.mxu0 %v170
    %204 = vmatpush.bf16.msra.mxu0 %v168
    %205 = vmatpush.bf16.msra.mxu0 %v166
    %206 = vmatmul.bf16.gmra.mxu0 %v116
    %v207 = vpop.f32.mrf.mxu0
    %v208 = vadd.f32 %v108, %v207
    %v209 = vpop.f32.mrf.mxu0
    %v210 = vadd.f32 %v108, %v209
    %211 = vdwg.mxu0
    %212 = vmatpush.bf16.msra.mxu0 %v181
    %213 = vmatpush.bf16.msra.mxu0 %v179
    %214 = vmatpush.bf16.msra.mxu0 %v177
    %215 = vmatpush.bf16.msra.mxu0 %v175
    %216 = vmatpush.bf16.msra.mxu0 %v173
    %217 = vmatpush.bf16.msra.mxu0 %v171
    %218 = vmatpush.bf16.msra.mxu0 %v169
    %219 = vmatpush.bf16.msra.mxu0 %v167
    %220 = vmatmul.bf16.gmra.mxu0 %v116
    %v221 = vpop.f32.mrf.mxu0
    %v222 = vadd.f32 %v109, %v221
    %v223 = vpop.f32.mrf.mxu0
    %v224 = vadd.f32 %v109, %v223
    %225 = vdwg.mxu0
    %v226 = vmax.f32 %v208, 0.0
    %v227 = vmax.f32 %v222, 0.0
    %v228 = vmax.f32 %v210, 0.0
    %v229 = vmax.f32 %v224, 0.0
    %v230 = vld [vmem:[#allocation2] sm:$0xff]
    %v231 = vld [vmem:[#allocation2 + $0x8] sm:$0xff]
    %v232 = vpack.c.bf16 %v228, %v226
    %v233 = vpack.c.bf16 %v229, %v227
    %v234 = vld [vmem:[#allocation9] sm:$0xf]
    %v235 = vld [vmem:[#allocation9 + $0x4] sm:$0xf]
    %v236 = vld [vmem:[#allocation9 + $0x8] sm:$0xf]
    %v237 = vld [vmem:[#allocation9 + $0xc] sm:$0xf]
    %v238 = vld [vmem:[#allocation9 + $0x10] sm:$0xf]
    %v239 = vld [vmem:[#allocation9 + $0x14] sm:$0xf]
    %v240 = vld [vmem:[#allocation9 + $0x18] sm:$0xf]
    %v241 = vld [vmem:[#allocation9 + $0x1c] sm:$0xf]
    %v242 = vld [vmem:[#allocation9 + $0x20] sm:$0xf]
    %v243 = vld [vmem:[#allocation9 + $0x24] sm:$0xf]
    %v244 = vld [vmem:[#allocation9 + $0x28] sm:$0xf]
    %v245 = vld [vmem:[#allocation9 + $0x2c] sm:$0xf]
    %v246 = vld [vmem:[#allocation9 + $0x30] sm:$0xf]
    %v247 = vld [vmem:[#allocation9 + $0x34] sm:$0xf]
    %v248 = vld [vmem:[#allocation9 + $0x38] sm:$0xf]
    %v249 = vld [vmem:[#allocation9 + $0x3c] sm:$0xf]
    %v250 = vld [vmem:[#allocation9 + $0x40] sm:$0xf]
    %v251 = vld [vmem:[#allocation9 + $0x44] sm:$0xf]
    %v252 = vld [vmem:[#allocation9 + $0x48] sm:$0xf]
    %v253 = vld [vmem:[#allocation9 + $0x4c] sm:$0xf]
    %v254 = vld [vmem:[#allocation9 + $0x50] sm:$0xf]
    %v255 = vld [vmem:[#allocation9 + $0x54] sm:$0xf]
    %v256 = vld [vmem:[#allocation9 + $0x58] sm:$0xf]
    %v257 = vld [vmem:[#allocation9 + $0x5c] sm:$0xf]
    %v258 = vld [vmem:[#allocation9 + $0x60] sm:$0xf]
    %v259 = vld [vmem:[#allocation9 + $0x64] sm:$0xf]
    %v260 = vld [vmem:[#allocation9 + $0x68] sm:$0xf]
    %v261 = vld [vmem:[#allocation9 + $0x6c] sm:$0xf]
    %v262 = vld [vmem:[#allocation9 + $0x70] sm:$0xf]
    %v263 = vld [vmem:[#allocation9 + $0x74] sm:$0xf]
    %v264 = vld [vmem:[#allocation9 + $0x78] sm:$0xf]
    %v265 = vld [vmem:[#allocation9 + $0x7c] sm:$0xf]
    %v298 = vunpack.c.l.b16 %v234
    %v299 = vunpack.c.l.b16 %v235
    %v300 = vunpack.c.l.b16 %v236
    %v301 = vunpack.c.l.b16 %v237
    %v302 = vunpack.c.l.b16 %v238
    %v303 = vunpack.c.l.b16 %v239
    %v304 = vunpack.c.l.b16 %v240
    %v305 = vunpack.c.l.b16 %v241
    %v306 = vunpack.c.l.b16 %v242
    %v307 = vunpack.c.l.b16 %v243
    %v308 = vunpack.c.l.b16 %v244
    %v309 = vunpack.c.l.b16 %v245
    %v310 = vunpack.c.l.b16 %v246
    %v311 = vunpack.c.l.b16 %v247
    %v312 = vunpack.c.l.b16 %v248
    %v313 = vunpack.c.l.b16 %v249
    %v314 = vunpack.c.l.b16 %v250
    %v315 = vunpack.c.l.b16 %v251
    %v316 = vunpack.c.l.b16 %v252
    %v317 = vunpack.c.l.b16 %v253
    %v318 = vunpack.c.l.b16 %v254
    %v319 = vunpack.c.l.b16 %v255
    %v320 = vunpack.c.l.b16 %v256
    %v321 = vunpack.c.l.b16 %v257
    %v322 = vunpack.c.l.b16 %v258
    %v323 = vunpack.c.l.b16 %v259
    %v324 = vunpack.c.l.b16 %v260
    %v325 = vunpack.c.l.b16 %v261
    %v326 = vunpack.c.l.b16 %v262
    %v327 = vunpack.c.l.b16 %v263
    %v328 = vunpack.c.l.b16 %v264
    %v329 = vunpack.c.l.b16 %v265
    %v330 = vpack.c.b16 %v299, %v298
    %v331 = vpack.c.b16 %v301, %v300
    %v332 = vpack.c.b16 %v303, %v302
    %v333 = vpack.c.b16 %v305, %v304
    %v334 = vpack.c.b16 %v307, %v306
    %v335 = vpack.c.b16 %v309, %v308
    %v336 = vpack.c.b16 %v311, %v310
    %v337 = vpack.c.b16 %v313, %v312
    %v338 = vpack.c.b16 %v315, %v314
    %v339 = vpack.c.b16 %v317, %v316
    %v340 = vpack.c.b16 %v319, %v318
    %v341 = vpack.c.b16 %v321, %v320
    %v342 = vpack.c.b16 %v323, %v322
    %v343 = vpack.c.b16 %v325, %v324
    %v344 = vpack.c.b16 %v327, %v326
    %v345 = vpack.c.b16 %v329, %v328
    %362 = vmatpush.bf16.msra.mxu0 %v337
    %363 = vmatpush.bf16.msra.mxu0 %v336
    %364 = vmatpush.bf16.msra.mxu0 %v335
    %365 = vmatpush.bf16.msra.mxu0 %v334
    %366 = vmatpush.bf16.msra.mxu0 %v333
    %367 = vmatpush.bf16.msra.mxu0 %v332
    %368 = vmatpush.bf16.msra.mxu0 %v331
    %369 = vmatpush.bf16.msra.mxu0 %v330
    %370 = vmatmul.bf16.gmra.mxu0 %v232
    %v371 = vpop.f32.mrf.mxu0
    %v372 = vadd.f32 0.0, %v371
    %v373 = vpop.f32.mrf.mxu0
    %v374 = vadd.f32 0.0, %v373
    %375 = vdwg.mxu0
    %376 = vmatpush.bf16.msra.mxu0 %v345
    %377 = vmatpush.bf16.msra.mxu0 %v344
    %378 = vmatpush.bf16.msra.mxu0 %v343
    %379 = vmatpush.bf16.msra.mxu0 %v342
    %380 = vmatpush.bf16.msra.mxu0 %v341
    %381 = vmatpush.bf16.msra.mxu0 %v340
    %382 = vmatpush.bf16.msra.mxu0 %v339
    %383 = vmatpush.bf16.msra.mxu0 %v338
    %384 = vmatmul.bf16.gmra.mxu0 %v233
    %v385 = vpop.f32.mrf.mxu0
    %v386 = vadd.f32 %v372, %v385
    %v387 = vpop.f32.mrf.mxu0
    %v388 = vadd.f32 %v374, %v387
    %389 = vdwg.mxu0
    %v390 = vadd.f32 %v230, %v386
    %v391 = vadd.f32 %v231, %v388
    %392 = vst [vmem:[#allocation2] sm:$0xff] %v390
    %393 = vst [vmem:[#allocation2 + $0x8] sm:$0xff] %v391
    // Predicated region
    $region42: #{tpu_custom_call.1} parent=1 // pred_check
      %p394 = pneg %p82
    $region43: #{tpu_custom_call.1} parent=1 // pred_check_branch
      %396 = sbr.rel (%p394) target = $region45
    $region44: #{tpu_custom_call.1} parent=1 // pred_region
      %v397 = vld [vmem:[#allocation2] sm:$0xff]
      %v398 = vld [vmem:[#allocation2 + $0x8] sm:$0xff]
      %v399 = vld [vmem:[%s4] sm:$0x1]
      %v401 = vperm.slane %v399, 0
      %v403 = vadd.f32 %v397, %v401
      %v404 = vadd.f32 %v398, %v401
      %405 = vst [vmem:[#allocation11] sm:$0xff] %v403
      %406 = vst [vmem:[#allocation11 + $0x8] sm:$0xff] %v404
    $region45: #{tpu_custom_call.1} parent=1 // pred_fallthru
      _
    // Predicated region
    $region46: #{tpu_custom_call.1} parent=1 // pred_check
      _
    $region47: #{tpu_custom_call.1} parent=1 // pred_check_branch
      %408 = sbr.rel (0) target = $region49
    $region48: #{tpu_custom_call.1} parent=1 // pred_region
      %410 = vsyncadd [#allocation5], 0
      %s411 = sshll.u32 [#allocation11], 4
      %s412 = int_to_ptr.vmem [resolvable:$true] %s411
      %s413 = sshll.u32 %s5, 4
      %s414 = int_to_ptr.hbm [resolvable:$true] %s413
      %419 = dma.vmem_to_hbm [thread:$0]  %s412, 256, %s414, [#allocation5], 128, 128, 8
    $region49: #{tpu_custom_call.1} parent=1 // pred_fallthru
      _
    // Predicated region
    $region50: #{tpu_custom_call.1} parent=1 // pred_check
      _
    $region51: #{tpu_custom_call.1} parent=1 // pred_check_branch
      %421 = sbr.rel (0) target = $region53
    $region52: #{tpu_custom_call.1} parent=1 // pred_region
      %423 = dma.done [#allocation5], 256
    $region53: #{tpu_custom_call.1} parent=1 // pred_fallthru
      _
    %424 = vsyncpa [#allocation4], 1
    %425 = vsyncpa [#allocation7], 1
    %426 = vsyncpa [#allocation10], 1
    %427 = vsyncpa [#allocation5], 1

</llo_original>
